<compile_context>
chip_gen: v5e
topology: v5e:2x2
jax: 0.10.0
libtpu: 0.0.40
codegen_flags: <defaults>
</compile_context>

<pallas_src>
import functools

import jax
import jax.numpy as jnp
from jax import lax
from jax.experimental import pallas as pl
from jax.experimental.pallas import tpu as pltpu


def _round_up(x, m):
    return (x + m - 1) // m * m


def _autofusion_kernel(x_ref, w1_ref, w2_ref, wt_ref, b_ref,
                       fused_ref, reconst_ref, class_ref,
                       *, inp1, inp1_pad, latent, num_classes, in_feat):
    f32 = jnp.float32
    cdt = w1_ref.dtype                 # matmul operand dtype (f32 or bf16)

    x = x_ref[...].astype(cdt)         # in-kernel cast: x stays f32 in HBM
    w1 = w1_ref[...]                   # (inp1, F)        PyTorch nn.Linear layout
    w2 = w2_ref[...]                   # (L, inp1)
    wt = wt_ref[...]                   # (L, inp1_pad+C)  = [W2 | 0 | Wc.T]
    b = b_ref[...]                     # (8, Wb) f32, one bias vector per sublane row

    b1 = b[0:1, :inp1]
    b2 = b[1:2, :latent]
    bc = b[2:3, :num_classes]
    b3 = b[3:4, :inp1]
    b4 = b[4:5, :in_feat]

    # A[m,k] x B[n,k] -> [m,n]  ("x @ W.T"; Mosaic handles this natively, no XLU transpose)
    nt = (((1,), (1,)), ((), ()))
    # A[m,k] x B[k,n] -> [m,n]  (tied-weight path: "@ W" untransposed)
    nn = (((1,), (0,)), ((), ()))

    # encoder
    h1 = jnp.tanh(lax.dot_general(x, w1, nt, preferred_element_type=f32) + b1)
    fused = jnp.maximum(
        lax.dot_general(h1.astype(cdt), w2, nt, preferred_element_type=f32) + b2,
        0.0)

    # single fused tail matmul: decoder step lives in lanes [0, inp1), the class
    # head in lanes [inp1_pad, inp1_pad+C) (128-aligned -> rotation-free slice).
    tail = lax.dot_general(fused.astype(cdt), wt, nn, preferred_element_type=f32)
    class_probs = tail[:, inp1_pad:inp1_pad + num_classes] + bc
    r = jnp.tanh(tail[:, :inp1] + b3)
    reconst = lax.dot_general(r.astype(cdt), w1, nn,
                              preferred_element_type=f32) + b4

    # full-width stores to three exact-shape outputs (no pad lanes in HBM)
    fused_ref[...] = fused.astype(fused_ref.dtype)
    reconst_ref[...] = reconst.astype(reconst_ref.dtype)
    class_ref[...] = class_probs.astype(class_ref.dtype)


def prepare_params(params, *, use_bf16=False):
    """One-time weight/bias packing. Do this OUTSIDE the serving/training loop."""
    cdt = jnp.bfloat16 if use_bf16 else jnp.float32
    w1 = params["w1"]                  # (inp1, F)
    w2 = params["w2"]                  # (L, inp1)
    wc = params["wc"]                  # (C, L)
    inp1, F = w1.shape
    L = w2.shape[0]
    C = wc.shape[0]
    inp1_pad = _round_up(inp1, 128)

    # fused tail weight: [W2 | zero pad | Wc.T] -> one MXU pass serves both the
    # decoder step (fused @ W2) and the class head (fused @ Wc.T).
    w_tail = jnp.zeros((L, inp1_pad + C), jnp.float32)
    w_tail = w_tail.at[:, :inp1].set(w2)
    w_tail = w_tail.at[:, inp1_pad:].set(wc.T)

    # the 5 tiny biases packed into one (8, Wb) f32 array (bias k on sublane k)
    Wb = _round_up(max(inp1, L, C, F), 128)
    bias = jnp.zeros((8, Wb), jnp.float32)
    bias = bias.at[0, :inp1].set(params["b1"].reshape(-1))
    bias = bias.at[1, :L].set(params["b2"].reshape(-1))
    bias = bias.at[2, :C].set(params["bc"].reshape(-1))
    bias = bias.at[3, :inp1].set(params["b3"].reshape(-1))
    bias = bias.at[4, :F].set(params["b4"].reshape(-1))

    return {
        "w1": w1.astype(cdt),
        "w2": w2.astype(cdt),
        "w_tail": w_tail.astype(cdt),
        "bias": bias,
        "dims": (inp1, inp1_pad, L, C, F),
        "use_bf16": use_bf16,
    }


def autofusion_forward(x, prep, *, tb=None):
    """x: [B, input_features] float32. prep: output of prepare_params.

    Returns (fused, reconst, class_probs), all float32.
    """
    B, F = x.shape
    inp1, inp1_pad, L, C, F_p = prep["dims"]
    assert F == F_p, "x feature dim does not match prepared params"

    cbytes = 2 if prep["use_bf16"] else 4
    w1, w2, wt, bias = prep["w1"], prep["w2"], prep["w_tail"], prep["bias"]

    # resident weights + double-buffered tiles must fit VMEM
    weight_bytes = (w1.size + w2.size + wt.size) * cbytes + bias.size * 4

    if tb is None:
        # per-row VMEM: x tile (f32, x2 buffers) + output tiles (f32, x2 buffers)
        # + f32 temporaries (h1, fused, tail, reconst)
        per_row = 2 * F * 4 + 2 * (L + F + C) * 4 \
            + (inp1 + L + (inp1_pad + C) + F) * 4
        budget = (40 << 20) - weight_bytes          # v7x-safe (64 MiB physical)
        tb = max(8, min(1024, (budget // max(per_row, 1)) // 8 * 8))
        if B <= tb:
            # small batch fits one tile; still split into 2 steps so both v7x
            # TensorCores get work when the batch splits evenly.
            tb = B // 2 if (B >= 16 and B % 16 == 0) else B

    io_bytes = 2 * tb * F * 4 + 2 * tb * (L + F + C) * 4
    tmp_bytes = tb * (inp1 + L + inp1_pad + C + F) * 4
    vmem_needed = weight_bytes + io_bytes + tmp_bytes
    if vmem_needed > (48 << 20):
        # TODO(synk): add a contraction-tiled (K-split) fallback for very large
        # input_features / inp1; the resident-weight scheme assumes they fit VMEM.
        raise ValueError(
            f"AutoFusion weights + tiles (~{vmem_needed >> 20} MiB) exceed the "
            "conservative VMEM budget; reduce tb or add K-tiling.")
    vmem_limit = int(min(64 << 20, max(32 << 20, vmem_needed * 3 // 2)))

    kernel = functools.partial(
        _autofusion_kernel,
        inp1=inp1, inp1_pad=inp1_pad, latent=L, num_classes=C, in_feat=F)

    # NOTE: if profiling shows exposed DMA, deepen input pipelining with
    # pipeline_mode=pl.Buffered(3) on the x BlockSpec (re-check VMEM on v7x).
    fused, reconst, class_probs = pl.pallas_call(
        kernel,
        out_shape=(
            jax.ShapeDtypeStruct((B, L), jnp.float32),
            jax.ShapeDtypeStruct((B, F), jnp.float32),
            jax.ShapeDtypeStruct((B, C), jnp.float32),
        ),
        grid=(pl.cdiv(B, tb),),                    # no jnp.pad: edge block masked
        in_specs=[
            pl.BlockSpec((tb, F), lambda i: (i, 0)),      # x tiled over batch
            pl.BlockSpec(w1.shape, lambda i: (0, 0)),     # weights resident
            pl.BlockSpec(w2.shape, lambda i: (0, 0)),
            pl.BlockSpec(wt.shape, lambda i: (0, 0)),
            pl.BlockSpec(bias.shape, lambda i: (0, 0)),   # packed biases
        ],
        out_specs=(
            pl.BlockSpec((tb, L), lambda i: (i, 0)),
            pl.BlockSpec((tb, F), lambda i: (i, 0)),
            pl.BlockSpec((tb, C), lambda i: (i, 0)),
        ),
        compiler_params=pltpu.CompilerParams(
            dimension_semantics=("parallel",),
            vmem_limit_bytes=vmem_limit),
    )(x, w1, w2, wt, bias)

    return fused, reconst, class_probs


def init_params(key, input_features, latent_features, num_classes=5):
    """Deterministic synthetic parameter init (PyTorch nn.Linear layouts)."""
    inp1 = input_features // 2
    ks = jax.random.split(key, 8)

    def u(k, shape, fan_in):
        bound = 1.0 / jnp.sqrt(fan_in)
        return jax.random.uniform(k, shape, jnp.float32, -bound, bound)

    return {
        "w1": u(ks[0], (inp1, input_features), input_features),
        "b1": u(ks[1], (1, inp1), input_features),
        "w2": u(ks[2], (latent_features, inp1), inp1),
        "b2": u(ks[3], (1, latent_features), inp1),
        "wc": u(ks[4], (num_classes, latent_features), latent_features),
        "bc": u(ks[5], (1, num_classes), latent_features),
        # linear3 / linear4 weights are tied (W2.T / W1.T); only biases are free.
        "b3": u(ks[6], (1, inp1), latent_features),
        "b4": u(ks[7], (1, input_features), inp1),
    }


def reference_forward(x, p):
    """Pure-JAX reference for correctness check."""
    h1 = jnp.tanh(x @ p["w1"].T + p["b1"])
    fused = jnp.maximum(h1 @ p["w2"].T + p["b2"], 0.0)
    class_probs = fused @ p["wc"].T + p["bc"]
    r = jnp.tanh(fused @ p["w2"] + p["b3"])
    reconst = r @ p["w1"] + p["b4"]
    return fused, reconst, class_probs


if __name__ == "__main__":
    key = jax.random.PRNGKey(0)
    k_x, k_p, k_x2 = jax.random.split(key, 3)

    B, input_features, latent_features, num_classes = 8, 32, 16, 5
    x = jax.random.normal(k_x, (B, input_features), jnp.float32)
    params = init_params(k_p, input_features, latent_features, num_classes)
    names = ("fused", "reconst", "class_probs")

    # f32 path; weights/biases packed once and reused across calls
    prep_f32 = prepare_params(params)
    outs = jax.block_until_ready(autofusion_forward(x, prep_f32))
    refs = reference_forward(x, params)
    for o, r, n in zip(outs, refs, names):
        assert o.shape == r.shape, f"{n} shape mismatch (f32)"
        assert jnp.allclose(o, r, atol=1e-4, rtol=1e-4), f"{n} mismatch (f32)"

    # non-tile-multiple batch exercises the masked edge block (no jnp.pad copy)
    x2 = jax.random.normal(k_x2, (1000, input_features), jnp.float32)
    outs2 = jax.block_until_ready(autofusion_forward(x2, prep_f32, tb=256))
    refs2 = reference_forward(x2, params)
    for o, r, n in zip(outs2, refs2, names):
        assert jnp.allclose(o, r, atol=1e-4, rtol=1e-4), f"{n} mismatch (f32 tiled)"

    # bf16 matmul operands (f32 accumulation + f32 activations); x stays f32 in
    # HBM and is cast in-kernel. Valid on v5e/v6e/v7x.
    prep_bf16 = prepare_params(params, use_bf16=True)
    outs_bf = jax.block_until_ready(autofusion_forward(x, prep_bf16))
    for o, r, n in zip(outs_bf, refs, names):
        assert jnp.allclose(o, r, atol=1e-1, rtol=1e-1), f"{n} mismatch (bf16)"

    print("KERNEL_OK")
</pallas_src>

<mosaic_0001>
module attributes {stable_mosaic.version = 11 : i64} {
  func.func @_autofusion_kernel(%arg0: i32, %arg1: memref<8x32xf32, #tpu.memory_space<vmem>>, %arg2: memref<16x32xf32, #tpu.memory_space<vmem>>, %arg3: memref<16x16xf32, #tpu.memory_space<vmem>>, %arg4: memref<16x133xf32, #tpu.memory_space<vmem>>, %arg5: memref<8x128xf32, #tpu.memory_space<vmem>>, %arg6: memref<8x16xf32, #tpu.memory_space<vmem>>, %arg7: memref<8x32xf32, #tpu.memory_space<vmem>>, %arg8: memref<8x5xf32, #tpu.memory_space<vmem>>) attributes {dimension_semantics = [#tpu.dimension_semantics<parallel>], iteration_bounds = array<i64: 1>, scalar_prefetch = 0 : i64, scratch_operands = 0 : i64, tpu.core_type = #tpu.core_type<tc>, window_params = [{transform_indices = @transform_0, window_bounds = array<i64: 8, 32>}, {pipeline_mode = #tpu.pipeline_mode<synchronous>, transform_indices = @transform_1, window_bounds = array<i64: 16, 32>}, {pipeline_mode = #tpu.pipeline_mode<synchronous>, transform_indices = @transform_2, window_bounds = array<i64: 16, 16>}, {pipeline_mode = #tpu.pipeline_mode<synchronous>, transform_indices = @transform_3, window_bounds = array<i64: 16, 133>}, {pipeline_mode = #tpu.pipeline_mode<synchronous>, transform_indices = @transform_4, window_bounds = array<i64: 8, 128>}, {transform_indices = @transform_5, window_bounds = array<i64: 8, 16>}, {transform_indices = @transform_6, window_bounds = array<i64: 8, 32>}, {transform_indices = @transform_7, window_bounds = array<i64: 8, 5>}]} {
    %c0 = arith.constant 0 : index
    %c0_0 = arith.constant 0 : index
    %0 = vector.load %arg1[%c0, %c0_0] : memref<8x32xf32, #tpu.memory_space<vmem>>, vector<8x32xf32>
    %c0_1 = arith.constant 0 : index
    %c0_2 = arith.constant 0 : index
    %1 = vector.load %arg2[%c0_1, %c0_2] : memref<16x32xf32, #tpu.memory_space<vmem>>, vector<16x32xf32>
    %c0_3 = arith.constant 0 : index
    %c0_4 = arith.constant 0 : index
    %2 = vector.load %arg3[%c0_3, %c0_4] : memref<16x16xf32, #tpu.memory_space<vmem>>, vector<16x16xf32>
    %c0_5 = arith.constant 0 : index
    %c0_6 = arith.constant 0 : index
    %3 = vector.load %arg4[%c0_5, %c0_6] : memref<16x133xf32, #tpu.memory_space<vmem>>, vector<16x133xf32>
    %c0_7 = arith.constant 0 : index
    %c0_8 = arith.constant 0 : index
    %4 = vector.load %arg5[%c0_7, %c0_8] : memref<8x128xf32, #tpu.memory_space<vmem>>, vector<8x128xf32>
    %5 = vector.extract_strided_slice %4 {offsets = [0, 0], sizes = [1, 16], strides = [1, 1]} : vector<8x128xf32> to vector<1x16xf32>
    %6 = vector.extract_strided_slice %4 {offsets = [1, 0], sizes = [1, 16], strides = [1, 1]} : vector<8x128xf32> to vector<1x16xf32>
    %7 = vector.extract_strided_slice %4 {offsets = [2, 0], sizes = [1, 5], strides = [1, 1]} : vector<8x128xf32> to vector<1x5xf32>
    %8 = vector.extract_strided_slice %4 {offsets = [3, 0], sizes = [1, 16], strides = [1, 1]} : vector<8x128xf32> to vector<1x16xf32>
    %9 = vector.extract_strided_slice %4 {offsets = [4, 0], sizes = [1, 32], strides = [1, 1]} : vector<8x128xf32> to vector<1x32xf32>
    %cst = arith.constant dense<0.000000e+00> : vector<8x16xf32>
    %10 = tpu.matmul %0, %1, %cst {dimension_numbers = #tpu.dot_dimension_numbers<[1], [1], [0], [0], [0, 0, 1, 0], [], []>} : vector<8x32xf32>, vector<16x32xf32>, vector<8x16xf32> -> vector<8x16xf32>
    %11 = vector.broadcast %5 : vector<1x16xf32> to vector<8x16xf32>
    %12 = arith.addf %10, %11 : vector<8x16xf32>
    %13 = math.tanh %12 : vector<8x16xf32>
    %cst_9 = arith.constant dense<0.000000e+00> : vector<8x16xf32>
    %14 = tpu.matmul %13, %2, %cst_9 {dimension_numbers = #tpu.dot_dimension_numbers<[1], [1], [0], [0], [0, 0, 1, 0], [], []>} : vector<8x16xf32>, vector<16x16xf32>, vector<8x16xf32> -> vector<8x16xf32>
    %15 = vector.broadcast %6 : vector<1x16xf32> to vector<8x16xf32>
    %16 = arith.addf %14, %15 : vector<8x16xf32>
    %cst_10 = arith.constant 0.000000e+00 : f32
    %17 = vector.broadcast %cst_10 : f32 to vector<8x16xf32>
    %18 = arith.maximumf %16, %17 : vector<8x16xf32>
    %cst_11 = arith.constant dense<0.000000e+00> : vector<8x133xf32>
    %19 = tpu.matmul %18, %3, %cst_11 {dimension_numbers = #tpu.dot_dimension_numbers<[1], [0], [0], [1], [0, 0, 1, 1], [], []>} : vector<8x16xf32>, vector<16x133xf32>, vector<8x133xf32> -> vector<8x133xf32>
    %20 = vector.extract_strided_slice %19 {offsets = [0, 128], sizes = [8, 5], strides = [1, 1]} : vector<8x133xf32> to vector<8x5xf32>
    %21 = vector.broadcast %7 : vector<1x5xf32> to vector<8x5xf32>
    %22 = arith.addf %20, %21 : vector<8x5xf32>
    %23 = vector.extract_strided_slice %19 {offsets = [0, 0], sizes = [8, 16], strides = [1, 1]} : vector<8x133xf32> to vector<8x16xf32>
    %24 = vector.broadcast %8 : vector<1x16xf32> to vector<8x16xf32>
    %25 = arith.addf %23, %24 : vector<8x16xf32>
    %26 = math.tanh %25 : vector<8x16xf32>
    %cst_12 = arith.constant dense<0.000000e+00> : vector<8x32xf32>
    %27 = tpu.matmul %26, %1, %cst_12 {dimension_numbers = #tpu.dot_dimension_numbers<[1], [0], [0], [1], [0, 0, 1, 1], [], []>} : vector<8x16xf32>, vector<16x32xf32>, vector<8x32xf32> -> vector<8x32xf32>
    %28 = vector.broadcast %9 : vector<1x32xf32> to vector<8x32xf32>
    %29 = arith.addf %27, %28 : vector<8x32xf32>
    %c0_13 = arith.constant 0 : index
    %c0_14 = arith.constant 0 : index
    %30 = vector.load %arg6[%c0_13, %c0_14] : memref<8x16xf32, #tpu.memory_space<vmem>>, vector<8x16xf32>
    tpu.vector_store %arg6[%c0_13, %c0_14], %18 {strides = array<i32>} : memref<8x16xf32, #tpu.memory_space<vmem>>, vector<8x16xf32>,
    %c0_15 = arith.constant 0 : index
    %c0_16 = arith.constant 0 : index
    %31 = vector.load %arg7[%c0_15, %c0_16] : memref<8x32xf32, #tpu.memory_space<vmem>>, vector<8x32xf32>
    tpu.vector_store %arg7[%c0_15, %c0_16], %29 {strides = array<i32>} : memref<8x32xf32, #tpu.memory_space<vmem>>, vector<8x32xf32>,
    %c0_17 = arith.constant 0 : index
    %c0_18 = arith.constant 0 : index
    %32 = vector.load %arg8[%c0_17, %c0_18] : memref<8x5xf32, #tpu.memory_space<vmem>>, vector<8x5xf32>
    tpu.vector_store %arg8[%c0_17, %c0_18], %22 {strides = array<i32>} : memref<8x5xf32, #tpu.memory_space<vmem>>, vector<8x5xf32>,
    return
  }
  func.func @transform_0(%arg0: i32) -> (i32, i32) {
    %c0_i32 = arith.constant 0 : i32
    %c0_i32_0 = arith.constant 0 : i32
    return %arg0, %c0_i32 : i32, i32
  }
  func.func @transform_1(%arg0: i32) -> (i32, i32) {
    %c0_i32 = arith.constant 0 : i32
    %c0_i32_0 = arith.constant 0 : i32
    %c0_i32_1 = arith.constant 0 : i32
    return %c0_i32, %c0_i32_0 : i32, i32
  }
  func.func @transform_2(%arg0: i32) -> (i32, i32) {
    %c0_i32 = arith.constant 0 : i32
    %c0_i32_0 = arith.constant 0 : i32
    %c0_i32_1 = arith.constant 0 : i32
    return %c0_i32, %c0_i32_0 : i32, i32
  }
  func.func @transform_3(%arg0: i32) -> (i32, i32) {
    %c0_i32 = arith.constant 0 : i32
    %c0_i32_0 = arith.constant 0 : i32
    %c0_i32_1 = arith.constant 0 : i32
    return %c0_i32, %c0_i32_0 : i32, i32
  }
  func.func @transform_4(%arg0: i32) -> (i32, i32) {
    %c0_i32 = arith.constant 0 : i32
    %c0_i32_0 = arith.constant 0 : i32
    %c0_i32_1 = arith.constant 0 : i32
    return %c0_i32, %c0_i32_0 : i32, i32
  }
  func.func @transform_5(%arg0: i32) -> (i32, i32) {
    %c0_i32 = arith.constant 0 : i32
    %c0_i32_0 = arith.constant 0 : i32
    return %arg0, %c0_i32 : i32, i32
  }
  func.func @transform_6(%arg0: i32) -> (i32, i32) {
    %c0_i32 = arith.constant 0 : i32
    %c0_i32_0 = arith.constant 0 : i32
    return %arg0, %c0_i32 : i32, i32
  }
  func.func @transform_7(%arg0: i32) -> (i32, i32) {
    %c0_i32 = arith.constant 0 : i32
    %c0_i32_0 = arith.constant 0 : i32
    return %arg0, %c0_i32 : i32, i32
  }
}

</mosaic_0001>

<llo_original>
// kernel: tpu_custom_call.1
$region0: #{tpu_custom_call.1}
  #allocation0 [shape = 'u32[]', space=smem, size = 0x4, offset = 0x4, fixed_abs, tag = 'smem constant byte address 0x4 - core index']
  #allocation1 [shape = 'u32[72,128]{1,0:T(1,128)}', space=vmem, size = 0x9000, scoped, tag = 'internal scratch']
  %s0 = inlined_call_operand.hbm [shape: f32[8,32], index: 0, kind: input, shape index: {}]
  %s1 = inlined_call_operand.hbm [shape: f32[16,32], index: 1, kind: input, shape index: {}]
  %s2 = inlined_call_operand.hbm [shape: f32[16,16], index: 2, kind: input, shape index: {}]
  %s3 = inlined_call_operand.hbm [shape: f32[16,133], index: 3, kind: input, shape index: {}]
  %s4 = inlined_call_operand.hbm [shape: f32[8,128], index: 4, kind: input, shape index: {}]
  %s5 = inlined_call_operand.hbm [shape: f32[8,16], index: 5, kind: output, shape index: {0}]
  %s6 = inlined_call_operand.hbm [shape: f32[8,32], index: 6, kind: output, shape index: {1}]
  %s7 = inlined_call_operand.hbm [shape: f32[8,5], index: 7, kind: output, shape index: {2}]
  %8 = xla_tuple %s5, %s6, %s7
  %s9 = sld [smem:[#allocation0]]
  $region66: #{tpu_custom_call.1} parent=0
    _
  %s11 = ssub.s32 1, %s9
  %s12 = scalar_select 0, %s11, %s9
  $region1: #{tpu_custom_call.1} parent=0
    #allocation2 [shape = 'u8[4096]{0}', space=vmem, size = 0x1000, scoped, tag = 'input window, operand 0, single buffered']
    #allocation3 [shape = 's32[1]{0}', space=sflag, size = 0x4, scoped, tag = 'scoped memory for tpu_custom_call.1']
    #allocation4 [shape = 's32[1]{0}', space=sflag, size = 0x4, scoped, tag = 'scoped memory for tpu_custom_call.1']
    #allocation5 [shape = 'u8[8192]{0}', space=vmem, size = 0x2000, scoped, tag = 'input window, operand 1, single buffered']
    #allocation6 [shape = 's32[1]{0}', space=sflag, size = 0x4, scoped, tag = 'scoped memory for tpu_custom_call.1']
    #allocation7 [shape = 'u8[8192]{0}', space=vmem, size = 0x2000, scoped, tag = 'input window, operand 2, single buffered']
    #allocation8 [shape = 'u8[16384]{0}', space=vmem, size = 0x4000, scoped, tag = 'input window, operand 3, single buffered']
    #allocation9 [shape = 's32[1]{0}', space=sflag, size = 0x4, scoped, tag = 'scoped memory for tpu_custom_call.1']
    #allocation10 [shape = 'u8[4096]{0}', space=vmem, size = 0x1000, scoped, tag = 'input window, operand 4, single buffered']
    #allocation11 [shape = 'u8[4096]{0}', space=vmem, size = 0x1000, scoped, tag = 'output window, operand 0, single buffered']
    #allocation12 [shape = 'u8[4096]{0}', space=vmem, size = 0x1000, scoped, tag = 'output window, operand 1, single buffered']
    #allocation13 [shape = 's32[1]{0}', space=sflag, size = 0x4, scoped, tag = 'scoped memory for tpu_custom_call.1']
    #allocation14 [shape = 'u8[4096]{0}', space=vmem, size = 0x1000, scoped, tag = 'output window, operand 2, single buffered']
    %13 = vsyncpa [#allocation3], 0
    %14 = vsyncpa [#allocation6], 0
    %15 = vsyncpa [#allocation9], 0
    %16 = vsyncpa [#allocation4], 0
    %17 = vsyncpa [#allocation13], 0
    // Predicated region
    $region2: #{tpu_custom_call.1} parent=1 // pred_check
      _
    $region3: #{tpu_custom_call.1} parent=1 // pred_check_branch
      %19 = sbr.rel (0) target = $region5
    $region4: #{tpu_custom_call.1} parent=1 // pred_region
      %21 = vsyncadd [#allocation3], 0
      %s23 = sshll.u32 %s0, 4
      %s24 = int_to_ptr.hbm [resolvable:$true] %s23
      %s25 = sshll.u32 [#allocation2], 4
      %s26 = int_to_ptr.vmem [resolvable:$true] %s25
      %28 = dma.hbm_to_vmem [thread:$0]  %s24, 128, %s26, [#allocation3]
    $region5: #{tpu_custom_call.1} parent=1 // pred_fallthru
      _
    // Predicated region
    $region6: #{tpu_custom_call.1} parent=1 // pred_check
      _
    $region7: #{tpu_custom_call.1} parent=1 // pred_check_branch
      %30 = sbr.rel (0) target = $region9
    $region8: #{tpu_custom_call.1} parent=1 // pred_region
      %32 = vsyncadd [#allocation6], 0
      %s33 = sshll.u32 %s1, 4
      %s34 = int_to_ptr.hbm [resolvable:$true] %s33
      %s35 = sshll.u32 [#allocation5], 4
      %s36 = int_to_ptr.vmem [resolvable:$true] %s35
      %41 = dma.hbm_to_vmem [thread:$0]  %s34, 256, %s36, [#allocation6], 128, 128, 8
    $region9: #{tpu_custom_call.1} parent=1 // pred_fallthru
      _
    // Predicated region
    $region10: #{tpu_custom_call.1} parent=1 // pred_check
      _
    $region11: #{tpu_custom_call.1} parent=1 // pred_check_branch
      %43 = sbr.rel (0) target = $region13
    $region12: #{tpu_custom_call.1} parent=1 // pred_region
      %45 = vsyncadd [#allocation6], 0
      %s46 = sshll.u32 %s2, 4
      %s47 = int_to_ptr.hbm [resolvable:$true] %s46
      %s48 = sshll.u32 [#allocation7], 4
      %s49 = int_to_ptr.vmem [resolvable:$true] %s48
      %54 = dma.hbm_to_vmem [thread:$0]  %s47, 256, %s49, [#allocation6], 128, 128, 8
    $region13: #{tpu_custom_call.1} parent=1 // pred_fallthru
      _
    // Predicated region
    $region14: #{tpu_custom_call.1} parent=1 // pred_check
      _
    $region15: #{tpu_custom_call.1} parent=1 // pred_check_branch
      %56 = sbr.rel (0) target = $region17
    $region16: #{tpu_custom_call.1} parent=1 // pred_region
      %58 = vsyncadd [#allocation9], 0
      %s59 = sshll.u32 %s3, 4
      %s60 = int_to_ptr.hbm [resolvable:$true] %s59
      %s61 = sshll.u32 [#allocation8], 4
      %s62 = int_to_ptr.vmem [resolvable:$true] %s61
      %67 = dma.hbm_to_vmem [thread:$0]  %s60, 512, %s62, [#allocation9], 256, 256, 16
    $region17: #{tpu_custom_call.1} parent=1 // pred_fallthru
      _
    // Predicated region
    $region18: #{tpu_custom_call.1} parent=1 // pred_check
      _
    $region19: #{tpu_custom_call.1} parent=1 // pred_check_branch
      %69 = sbr.rel (0) target = $region21
    $region20: #{tpu_custom_call.1} parent=1 // pred_region
      %71 = vsyncadd [#allocation9], 0
      %s73 = sshll.u32 %s4, 4
      %s74 = int_to_ptr.hbm [resolvable:$true] %s73
      %s75 = sshll.u32 [#allocation10], 4
      %s76 = int_to_ptr.vmem [resolvable:$true] %s75
      %78 = dma.hbm_to_vmem [thread:$0]  %s74, 128, %s76, [#allocation9]
    $region21: #{tpu_custom_call.1} parent=1 // pred_fallthru
      _
    // Predicated region
    $region22: #{tpu_custom_call.1} parent=1 // pred_check
      _
    $region23: #{tpu_custom_call.1} parent=1 // pred_check_branch
      %80 = sbr.rel (0) target = $region25
    $region24: #{tpu_custom_call.1} parent=1 // pred_region
      %82 = dma.done [#allocation3], 128
    $region25: #{tpu_custom_call.1} parent=1 // pred_fallthru
      _
    // Predicated region
    $region26: #{tpu_custom_call.1} parent=1 // pred_check
      _
    $region27: #{tpu_custom_call.1} parent=1 // pred_check_branch
      %84 = sbr.rel (0) target = $region29
    $region28: #{tpu_custom_call.1} parent=1 // pred_region
      %86 = dma.done [#allocation6], 256
    $region29: #{tpu_custom_call.1} parent=1 // pred_fallthru
      _
    // Predicated region
    $region30: #{tpu_custom_call.1} parent=1 // pred_check
      _
    $region31: #{tpu_custom_call.1} parent=1 // pred_check_branch
      %88 = sbr.rel (0) target = $region33
    $region32: #{tpu_custom_call.1} parent=1 // pred_region
      %90 = dma.done [#allocation6], 256
    $region33: #{tpu_custom_call.1} parent=1 // pred_fallthru
      _
    // Predicated region
    $region34: #{tpu_custom_call.1} parent=1 // pred_check
      _
    $region35: #{tpu_custom_call.1} parent=1 // pred_check_branch
      %92 = sbr.rel (0) target = $region37
    $region36: #{tpu_custom_call.1} parent=1 // pred_region
      %94 = dma.done [#allocation9], 512
    $region37: #{tpu_custom_call.1} parent=1 // pred_fallthru
      _
    // Predicated region
    $region38: #{tpu_custom_call.1} parent=1 // pred_check
      _
    $region39: #{tpu_custom_call.1} parent=1 // pred_check_branch
      %96 = sbr.rel (0) target = $region41
    $region40: #{tpu_custom_call.1} parent=1 // pred_region
      %98 = dma.done [#allocation9], 128
    $region41: #{tpu_custom_call.1} parent=1 // pred_fallthru
      _
    %v99 = vld [vmem:[#allocation2] sm:$0xff]
    %v100 = vld [vmem:[#allocation5] sm:$0xff]
    %v101 = vld [vmem:[#allocation5 + $0x8] sm:$0xff]
    %v102 = vld [vmem:[#allocation7] sm:$0xff]
    %v103 = vld [vmem:[#allocation7 + $0x8] sm:$0xff]
    %v104 = vld [vmem:[#allocation8] sm:$0xff]
    %v105 = vld [vmem:[#allocation8 + $0x8] sm:$0xff]
    %v106 = vld [vmem:[#allocation8 + $0x10] sm:$0xff]
    %v107 = vld [vmem:[#allocation8 + $0x18] sm:$0xff]
    %v108 = vld [vmem:[#allocation10] sm:$0xff]
    %v109 = vperm.slane %v108, 0
    %vm110 = vcmask 261120
    %v112 = vsel %vm110, %v99, 0
    %v115 = vsel %vm110, %v100, 0
    %v118 = vsel %vm110, %v101, 0
    %120 = vmatpush.xpose.msra.mxu0 0.0
    %121 = vmatpush.xpose.msra.mxu0 0.0
    %122 = vmatpush.xpose.msra.mxu0 0.0
    %123 = vmatpush.xpose.msra.mxu0 0.0
    %124 = vmatpush.xpose.msra.mxu0 0.0
    %125 = vmatpush.xpose.msra.mxu0 0.0
    %126 = vmatpush.xpose.msra.mxu0 0.0
    %127 = vmatpush.xpose.msra.mxu0 0.0
    %128 = vmatpush.xpose.msra.mxu0 0.0
    %129 = vmatpush.xpose.msra.mxu0 0.0
    %130 = vmatpush.xpose.msra.mxu0 0.0
    %131 = vmatpush.xpose.msra.mxu0 0.0
    %132 = vmatpush.xpose.msra.mxu0 0.0
    %133 = vmatpush.xpose.msra.mxu0 0.0
    %134 = vmatpush.xpose.msra.mxu0 %v118
    %135 = vmatpush.xpose.msra.mxu0 %v115
    %136 = vmatmul.f32.gmra.mxu0 %v112
    %v137 = vpop.f32.mrf.mxu0
    %v138 = vadd.f32 %v109, %v137
    %139 = vdwg.mxu0
    %v140 = vtanh.pop %v138
    %v141 = vperm.slane %v108, 1
    %vm142 = vcmask 130048
    %v144 = vsel %vm142, %v140, 0
    %v147 = vsel %vm142, %v102, 0
    %v150 = vsel %vm142, %v103, 0
    %152 = vmatpush.xpose.msra.mxu0 0.0
    %153 = vmatpush.xpose.msra.mxu0 0.0
    %154 = vmatpush.xpose.msra.mxu0 0.0
    %155 = vmatpush.xpose.msra.mxu0 0.0
    %156 = vmatpush.xpose.msra.mxu0 0.0
    %157 = vmatpush.xpose.msra.mxu0 0.0
    %158 = vmatpush.xpose.msra.mxu0 0.0
    %159 = vmatpush.xpose.msra.mxu0 0.0
    %160 = vmatpush.xpose.msra.mxu0 0.0
    %161 = vmatpush.xpose.msra.mxu0 0.0
    %162 = vmatpush.xpose.msra.mxu0 0.0
    %163 = vmatpush.xpose.msra.mxu0 0.0
    %164 = vmatpush.xpose.msra.mxu0 0.0
    %165 = vmatpush.xpose.msra.mxu0 0.0
    %166 = vmatpush.xpose.msra.mxu0 %v150
    %167 = vmatpush.xpose.msra.mxu0 %v147
    %168 = vmatmul.f32.gmra.mxu0 %v144
    %v169 = vpop.f32.mrf.mxu0
    %v170 = vadd.f32 %v141, %v169
    %171 = vdwg.mxu0
    %v172 = vmax.f32 %v170, 0.0
    %v174 = vsel %vm142, %v172, 0
    %176 = vmatpush.msra.mxu0 0.0
    %177 = vmatpush.msra.mxu0 0.0
    %178 = vmatpush.msra.mxu0 0.0
    %179 = vmatpush.msra.mxu0 0.0
    %180 = vmatpush.msra.mxu0 0.0
    %181 = vmatpush.msra.mxu0 0.0
    %182 = vmatpush.msra.mxu0 0.0
    %183 = vmatpush.msra.mxu0 0.0
    %184 = vmatpush.msra.mxu0 0.0
    %185 = vmatpush.msra.mxu0 0.0
    %186 = vmatpush.msra.mxu0 0.0
    %187 = vmatpush.msra.mxu0 0.0
    %188 = vmatpush.msra.mxu0 0.0
    %189 = vmatpush.msra.mxu0 0.0
    %190 = vmatpush.msra.mxu0 %v106
    %191 = vmatpush.msra.mxu0 %v104
    %192 = vmatmul.f32.gmra.mxu0 %v174
    %v193 = vpop.f32.mrf.mxu0
    %v194 = vadd.f32 0.0, %v193
    %195 = vdwg.mxu0
    %196 = vmatpush.msra.mxu0 0.0
    %197 = vmatpush.msra.mxu0 0.0
    %198 = vmatpush.msra.mxu0 0.0
    %199 = vmatpush.msra.mxu0 0.0
    %200 = vmatpush.msra.mxu0 0.0
    %201 = vmatpush.msra.mxu0 0.0
    %202 = vmatpush.msra.mxu0 0.0
    %203 = vmatpush.msra.mxu0 0.0
    %204 = vmatpush.msra.mxu0 0.0
    %205 = vmatpush.msra.mxu0 0.0
    %206 = vmatpush.msra.mxu0 0.0
    %207 = vmatpush.msra.mxu0 0.0
    %208 = vmatpush.msra.mxu0 0.0
    %209 = vmatpush.msra.mxu0 0.0
    %210 = vmatpush.msra.mxu0 %v107
    %211 = vmatpush.msra.mxu0 %v105
    %212 = vmatmul.f32.gmra.mxu0 %v174
    %v213 = vpop.f32.mrf.mxu0
    %v214 = vadd.f32 0.0, %v213
    %215 = vdwg.mxu0
    %v216 = vperm.slane %v108, 2
    %v217 = vadd.f32 %v214, %v216
    %v218 = vperm.slane %v108, 3
    %v219 = vadd.f32 %v194, %v218
    %v220 = vtanh.pop %v219
    %v221 = vperm.slane %v108, 4
    %v223 = vsel %vm142, %v220, 0
    %225 = vmatpush.msra.mxu0 0.0
    %226 = vmatpush.msra.mxu0 0.0
    %227 = vmatpush.msra.mxu0 0.0
    %228 = vmatpush.msra.mxu0 0.0
    %229 = vmatpush.msra.mxu0 0.0
    %230 = vmatpush.msra.mxu0 0.0
    %231 = vmatpush.msra.mxu0 0.0
    %232 = vmatpush.msra.mxu0 0.0
    %233 = vmatpush.msra.mxu0 0.0
    %234 = vmatpush.msra.mxu0 0.0
    %235 = vmatpush.msra.mxu0 0.0
    %236 = vmatpush.msra.mxu0 0.0
    %237 = vmatpush.msra.mxu0 0.0
    %238 = vmatpush.msra.mxu0 0.0
    %239 = vmatpush.msra.mxu0 %v101
    %240 = vmatpush.msra.mxu0 %v100
    %241 = vmatmul.f32.gmra.mxu0 %v223
    %v242 = vpop.f32.mrf.mxu0
    %v243 = vadd.f32 %v221, %v242
    %244 = vdwg.mxu0
    %245 = vst.msk [vmem:[#allocation11] sm:$0xff] %vm142, %v172
    %246 = vst.msk [vmem:[#allocation12] sm:$0xff] %vm110, %v243
    %vm247 = vcmask 39936
    %248 = vst.msk [vmem:[#allocation14] sm:$0xff] %vm247, %v217
    // Predicated region
    $region42: #{tpu_custom_call.1} parent=1 // pred_check
      _
    $region43: #{tpu_custom_call.1} parent=1 // pred_check_branch
      %250 = sbr.rel (0) target = $region45
    $region44: #{tpu_custom_call.1} parent=1 // pred_region
      %252 = vsyncadd [#allocation4], 0
      %s254 = sshll.u32 [#allocation11], 4
      %s255 = int_to_ptr.vmem [resolvable:$true] %s254
      %s256 = sshll.u32 %s5, 4
      %s257 = int_to_ptr.hbm [resolvable:$true] %s256
      %259 = dma.vmem_to_hbm [thread:$0]  %s255, 128, %s257, [#allocation4]
    $region45: #{tpu_custom_call.1} parent=1 // pred_fallthru
      _
    // Predicated region
    $region46: #{tpu_custom_call.1} parent=1 // pred_check
      _
    $region47: #{tpu_custom_call.1} parent=1 // pred_check_branch
      %261 = sbr.rel (0) target = $region49
    $region48: #{tpu_custom_call.1} parent=1 // pred_region
      %263 = vsyncadd [#allocation13], 0
      %s265 = sshll.u32 [#allocation12], 4
      %s266 = int_to_ptr.vmem [resolvable:$true] %s265
      %s267 = sshll.u32 %s6, 4
      %s268 = int_to_ptr.hbm [resolvable:$true] %s267
      %270 = dma.vmem_to_hbm [thread:$0]  %s266, 128, %s268, [#allocation13]
    $region49: #{tpu_custom_call.1} parent=1 // pred_fallthru
      _
    // Predicated region
    $region50: #{tpu_custom_call.1} parent=1 // pred_check
      _
    $region51: #{tpu_custom_call.1} parent=1 // pred_check_branch
      %272 = sbr.rel (0) target = $region53
    $region52: #{tpu_custom_call.1} parent=1 // pred_region
      %274 = vsyncadd [#allocation13], 0
      %s276 = sshll.u32 [#allocation14], 4
      %s277 = int_to_ptr.vmem [resolvable:$true] %s276
      %s278 = sshll.u32 %s7, 4
      %s279 = int_to_ptr.hbm [resolvable:$true] %s278
      %281 = dma.vmem_to_hbm [thread:$0]  %s277, 128, %s279, [#allocation13]
    $region53: #{tpu_custom_call.1} parent=1 // pred_fallthru
      _
    // Predicated region
    $region54: #{tpu_custom_call.1} parent=1 // pred_check
      _
    $region55: #{tpu_custom_call.1} parent=1 // pred_check_branch
      %283 = sbr.rel (0) target = $region57
    $region56: #{tpu_custom_call.1} parent=1 // pred_region
      %285 = dma.done [#allocation4], 128
    $region57: #{tpu_custom_call.1} parent=1 // pred_fallthru
      _
    // Predicated region
    $region58: #{tpu_custom_call.1} parent=1 // pred_check
      _
    $region59: #{tpu_custom_call.1} parent=1 // pred_check_branch
      %287 = sbr.rel (0) target = $region61
    $region60: #{tpu_custom_call.1} parent=1 // pred_region
      %289 = dma.done [#allocation13], 128
    $region61: #{tpu_custom_call.1} parent=1 // pred_fallthru
      _
    // Predicated region
    $region62: #{tpu_custom_call.1} parent=1 // pred_check
      _
    $region63: #{tpu_custom_call.1} parent=1 // pred_check_branch
      %291 = sbr.rel (0) target = $region65
    $region64: #{tpu_custom_call.1} parent=1 // pred_region
      %293 = dma.done [#allocation13], 128
    $region65: #{tpu_custom_call.1} parent=1 // pred_fallthru
      _
    %294 = vsyncpa [#allocation3], 1
    %295 = vsyncpa [#allocation6], 1
    %296 = vsyncpa [#allocation9], 1
    %297 = vsyncpa [#allocation4], 1
    %298 = vsyncpa [#allocation13], 1

</llo_original>
